<compile_context>
chip_gen: v7x
topology: tpu7x:2x2x1
jax: 0.10.0
libtpu: 0.0.40
codegen_flags: <defaults>
</compile_context>

<pallas_src>
import functools

import jax
import jax.numpy as jnp
from jax import lax
from jax.experimental import pallas as pl
from jax.experimental.pallas import tpu as pltpu


def _self_output_kernel(x_ref, res_ref, w_ref, b_ref, g_ref, beta_ref, o_ref, *, eps):
    # x_ref/res_ref: [TM, H] row tile; w_ref: [H, H] (PyTorch layout: [out, in]);
    # b_ref/g_ref/beta_ref: [1, H] (same block every grid step -> fetched once).
    x = x_ref[...]
    w = w_ref[...]

    # nn.Linear: x @ W.T + b. Contract the last (in-feature) dim of BOTH operands so
    # the MXU consumes W in its stored layout -- no XLU transpose / VMEM copy.
    y = lax.dot_general(
        x, w,
        dimension_numbers=(((1,), (1,)), ((), ())),
        preferred_element_type=jnp.float32,
    )
    y = y + b_ref[...].astype(jnp.float32)

    # TODO(synk): hidden_dropout omitted (eval-mode identity); training-mode PyTorch RNG not reproduced.

    z = y + res_ref[...].astype(jnp.float32)

    # TF-style LayerNorm over the hidden axis, all math in f32.
    u = jnp.mean(z, axis=-1, keepdims=True)
    d = z - u
    var = jnp.mean(d * d, axis=-1, keepdims=True)
    inv = lax.rsqrt(var + eps)                       # EUP slot -> effectively free
    out = d * inv * g_ref[...].astype(jnp.float32) + beta_ref[...].astype(jnp.float32)

    o_ref[...] = out.astype(o_ref.dtype)             # lane-dense [TM, H] store


def _pick_row_tile(m):
    # Biggest sublane-aligned row tile that evenly divides M (keeps blocks large,
    # avoids partial blocks); falls back to the full extent for tiny inputs.
    for tm in (512, 256, 128, 64, 32, 16, 8):
        if m % tm == 0:
            return tm
    return m


def bert_self_output(hidden_states, input_tensor, params, *, eps=1e-12):
    """hidden_states, input_tensor: [B, S, H]. Returns [B, S, H]."""
    B, S, H = hidden_states.shape
    assert input_tensor.shape == (B, S, H)
    M = B * S

    # Flattening (B, S) -> M is a free, contiguous reshape (no HBM transpose).
    x2 = hidden_states.reshape(M, H)
    r2 = input_tensor.reshape(M, H)
    w = params["dense_w"]                    # [H, H]  (out_features, in_features)
    b = params["dense_b"].reshape(1, H)
    g = params["ln_w"].reshape(1, H)
    beta = params["ln_b"].reshape(1, H)

    tm = _pick_row_tile(M)
    grid = (M // tm,)

    kernel = functools.partial(_self_output_kernel, eps=eps)

    out = pl.pallas_call(
        kernel,
        out_shape=jax.ShapeDtypeStruct((M, H), hidden_states.dtype),
        grid=grid,
        in_specs=[
            pl.BlockSpec((tm, H), lambda i: (i, 0)),   # hidden_states rows
            pl.BlockSpec((tm, H), lambda i: (i, 0)),   # residual rows
            pl.BlockSpec((H, H), lambda i: (0, 0)),    # dense weight (constant block)
            pl.BlockSpec((1, H), lambda i: (0, 0)),    # dense bias
            pl.BlockSpec((1, H), lambda i: (0, 0)),    # LN gamma
            pl.BlockSpec((1, H), lambda i: (0, 0)),    # LN beta
        ],
        out_specs=pl.BlockSpec((tm, H), lambda i: (i, 0)),
        compiler_params=pltpu.CompilerParams(
            dimension_semantics=("parallel",)),        # shards row tiles across TCs (v7x)
    )(x2, r2, w, b, g, beta)

    return out.reshape(B, S, H)


def _reference(hidden_states, input_tensor, params, *, eps=1e-12):
    """Pure-JAX mirror of the PyTorch forward (eval-mode dropout)."""
    y = hidden_states @ params["dense_w"].T + params["dense_b"]
    z = y + input_tensor
    u = jnp.mean(z, axis=-1, keepdims=True)
    s = jnp.mean((z - u) ** 2, axis=-1, keepdims=True)
    zn = (z - u) / jnp.sqrt(s + eps)
    return params["ln_w"] * zn + params["ln_b"]


if __name__ == "__main__":
    B, S, H = 2, 8, 32

    key = jax.random.PRNGKey(0)
    keys = jax.random.split(key, 6)

    params = {
        "dense_w": jax.random.normal(keys[0], (H, H), jnp.float32) * 0.02,
        "dense_b": jax.random.normal(keys[1], (H,), jnp.float32) * 0.02,
        "ln_w": jnp.ones((H,), jnp.float32)
                + jax.random.normal(keys[2], (H,), jnp.float32) * 0.01,
        "ln_b": jax.random.normal(keys[3], (H,), jnp.float32) * 0.01,
    }

    hidden_states = jax.random.normal(keys[4], (B, S, H), jnp.float32)
    input_tensor = jax.random.normal(keys[5], (B, S, H), jnp.float32)

    out = bert_self_output(hidden_states, input_tensor, params)
    out = jax.block_until_ready(out)

    ref = _reference(hidden_states, input_tensor, params)
    assert out.shape == (B, S, H)
    assert jnp.allclose(out, ref, atol=1e-4, rtol=1e-4), "mismatch vs reference"

    print("KERNEL_OK")
</pallas_src>

<mosaic_0001>
module attributes {stable_mosaic.version = 11 : i64} {
  func.func @_self_output_kernel(%arg0: i32, %arg1: memref<16x32xf32, #tpu.memory_space<vmem>>, %arg2: memref<16x32xf32, #tpu.memory_space<vmem>>, %arg3: memref<32x32xf32, #tpu.memory_space<vmem>>, %arg4: memref<1x32xf32, #tpu.memory_space<vmem>>, %arg5: memref<1x32xf32, #tpu.memory_space<vmem>>, %arg6: memref<1x32xf32, #tpu.memory_space<vmem>>, %arg7: memref<16x32xf32, #tpu.memory_space<vmem>>) attributes {dimension_semantics = [#tpu.dimension_semantics<parallel>], iteration_bounds = array<i64: 1>, scalar_prefetch = 0 : i64, scratch_operands = 0 : i64, tpu.core_type = #tpu.core_type<tc>, window_params = [{transform_indices = @transform_0, window_bounds = array<i64: 16, 32>}, {transform_indices = @transform_1, window_bounds = array<i64: 16, 32>}, {pipeline_mode = #tpu.pipeline_mode<synchronous>, transform_indices = @transform_2, window_bounds = array<i64: 32, 32>}, {pipeline_mode = #tpu.pipeline_mode<synchronous>, transform_indices = @transform_3, window_bounds = array<i64: 1, 32>}, {pipeline_mode = #tpu.pipeline_mode<synchronous>, transform_indices = @transform_4, window_bounds = array<i64: 1, 32>}, {pipeline_mode = #tpu.pipeline_mode<synchronous>, transform_indices = @transform_5, window_bounds = array<i64: 1, 32>}, {transform_indices = @transform_6, window_bounds = array<i64: 16, 32>}]} {
    %c0 = arith.constant 0 : index
    %c0_0 = arith.constant 0 : index
    %0 = vector.load %arg1[%c0, %c0_0] : memref<16x32xf32, #tpu.memory_space<vmem>>, vector<16x32xf32>
    %c0_1 = arith.constant 0 : index
    %c0_2 = arith.constant 0 : index
    %1 = vector.load %arg3[%c0_1, %c0_2] : memref<32x32xf32, #tpu.memory_space<vmem>>, vector<32x32xf32>
    %cst = arith.constant dense<0.000000e+00> : vector<16x32xf32>
    %2 = tpu.matmul %0, %1, %cst {dimension_numbers = #tpu.dot_dimension_numbers<[1], [1], [0], [0], [0, 0, 1, 0], [], []>} : vector<16x32xf32>, vector<32x32xf32>, vector<16x32xf32> -> vector<16x32xf32>
    %c0_3 = arith.constant 0 : index
    %c0_4 = arith.constant 0 : index
    %3 = vector.load %arg4[%c0_3, %c0_4] : memref<1x32xf32, #tpu.memory_space<vmem>>, vector<1x32xf32>
    %4 = vector.broadcast %3 : vector<1x32xf32> to vector<16x32xf32>
    %5 = arith.addf %2, %4 : vector<16x32xf32>
    %c0_5 = arith.constant 0 : index
    %c0_6 = arith.constant 0 : index
    %6 = vector.load %arg2[%c0_5, %c0_6] : memref<16x32xf32, #tpu.memory_space<vmem>>, vector<16x32xf32>
    %7 = arith.addf %5, %6 : vector<16x32xf32>
    %cst_7 = arith.constant dense<0.000000e+00> : vector<16xf32>
    %8 = vector.multi_reduction <add>, %7, %cst_7 [1] : vector<16x32xf32> to vector<16xf32>
    %9 = vector.shape_cast %8 : vector<16xf32> to vector<16x1xf32>
    %cst_8 = arith.constant 3.200000e+01 : f32
    %10 = vector.broadcast %cst_8 : f32 to vector<16x1xf32>
    %11 = arith.divf %9, %10 : vector<16x1xf32>
    %12 = vector.broadcast %11 : vector<16x1xf32> to vector<16x32xf32>
    %13 = arith.subf %7, %12 : vector<16x32xf32>
    %14 = arith.mulf %13, %13 : vector<16x32xf32>
    %cst_9 = arith.constant dense<0.000000e+00> : vector<16xf32>
    %15 = vector.multi_reduction <add>, %14, %cst_9 [1] : vector<16x32xf32> to vector<16xf32>
    %16 = vector.shape_cast %15 : vector<16xf32> to vector<16x1xf32>
    %cst_10 = arith.constant 3.200000e+01 : f32
    %17 = vector.broadcast %cst_10 : f32 to vector<16x1xf32>
    %18 = arith.divf %16, %17 : vector<16x1xf32>
    %cst_11 = arith.constant 9.99999996E-13 : f32
    %19 = vector.broadcast %cst_11 : f32 to vector<16x1xf32>
    %20 = arith.addf %18, %19 : vector<16x1xf32>
    %21 = math.rsqrt %20 : vector<16x1xf32>
    %22 = vector.broadcast %21 : vector<16x1xf32> to vector<16x32xf32>
    %23 = arith.mulf %13, %22 : vector<16x32xf32>
    %c0_12 = arith.constant 0 : index
    %c0_13 = arith.constant 0 : index
    %24 = vector.load %arg5[%c0_12, %c0_13] : memref<1x32xf32, #tpu.memory_space<vmem>>, vector<1x32xf32>
    %25 = vector.broadcast %24 : vector<1x32xf32> to vector<16x32xf32>
    %26 = arith.mulf %23, %25 : vector<16x32xf32>
    %c0_14 = arith.constant 0 : index
    %c0_15 = arith.constant 0 : index
    %27 = vector.load %arg6[%c0_14, %c0_15] : memref<1x32xf32, #tpu.memory_space<vmem>>, vector<1x32xf32>
    %28 = vector.broadcast %27 : vector<1x32xf32> to vector<16x32xf32>
    %29 = arith.addf %26, %28 : vector<16x32xf32>
    %c0_16 = arith.constant 0 : index
    %c0_17 = arith.constant 0 : index
    %30 = vector.load %arg7[%c0_16, %c0_17] : memref<16x32xf32, #tpu.memory_space<vmem>>, vector<16x32xf32>
    tpu.vector_store %arg7[%c0_16, %c0_17], %29 {strides = array<i32>} : memref<16x32xf32, #tpu.memory_space<vmem>>, vector<16x32xf32>,
    return
  }
  func.func @transform_0(%arg0: i32) -> (i32, i32) {
    %c0_i32 = arith.constant 0 : i32
    %c0_i32_0 = arith.constant 0 : i32
    return %arg0, %c0_i32 : i32, i32
  }
  func.func @transform_1(%arg0: i32) -> (i32, i32) {
    %c0_i32 = arith.constant 0 : i32
    %c0_i32_0 = arith.constant 0 : i32
    return %arg0, %c0_i32 : i32, i32
  }
  func.func @transform_2(%arg0: i32) -> (i32, i32) {
    %c0_i32 = arith.constant 0 : i32
    %c0_i32_0 = arith.constant 0 : i32
    %c0_i32_1 = arith.constant 0 : i32
    return %c0_i32, %c0_i32_0 : i32, i32
  }
  func.func @transform_3(%arg0: i32) -> (i32, i32) {
    %c0_i32 = arith.constant 0 : i32
    %c0_i32_0 = arith.constant 0 : i32
    %c0_i32_1 = arith.constant 0 : i32
    return %c0_i32, %c0_i32_0 : i32, i32
  }
  func.func @transform_4(%arg0: i32) -> (i32, i32) {
    %c0_i32 = arith.constant 0 : i32
    %c0_i32_0 = arith.constant 0 : i32
    %c0_i32_1 = arith.constant 0 : i32
    return %c0_i32, %c0_i32_0 : i32, i32
  }
  func.func @transform_5(%arg0: i32) -> (i32, i32) {
    %c0_i32 = arith.constant 0 : i32
    %c0_i32_0 = arith.constant 0 : i32
    %c0_i32_1 = arith.constant 0 : i32
    return %c0_i32, %c0_i32_0 : i32, i32
  }
  func.func @transform_6(%arg0: i32) -> (i32, i32) {
    %c0_i32 = arith.constant 0 : i32
    %c0_i32_0 = arith.constant 0 : i32
    return %arg0, %c0_i32 : i32, i32
  }
}

</mosaic_0001>

<llo_original>
// kernel: tpu_custom_call.1
$region0: #{tpu_custom_call.1}
  #allocation0 [shape = 'u32[]', space=smem, size = 0x4, offset = 0x4, fixed_abs, tag = 'smem constant byte address 0x4 - core index']
  #allocation1 [shape = 'u32[144,128]{1,0:T(1,128)}', space=vmem, size = 0x12000, scoped, tag = 'internal scratch']
  %s0 = inlined_call_operand.hbm [shape: f32[16,32], index: 0, kind: input, shape index: {}]
  %s1 = inlined_call_operand.hbm [shape: f32[16,32], index: 1, kind: input, shape index: {}]
  %s2 = inlined_call_operand.hbm [shape: f32[32,32], index: 2, kind: input, shape index: {}]
  %s3 = inlined_call_operand.vmem [shape: f32[1,32], index: 3, kind: input, shape index: {}]
  %s4 = inlined_call_operand.vmem [shape: f32[1,32], index: 4, kind: input, shape index: {}]
  %s5 = inlined_call_operand.vmem [shape: f32[1,32], index: 5, kind: input, shape index: {}]
  %s6 = inlined_call_operand.hbm [shape: f32[16,32], index: 6, kind: output, shape index: {}]
  %s7 = sld [smem:[#allocation0]]
  $region46: #{tpu_custom_call.1} parent=0
    _
  %s9 = ssub.s32 1, %s7
  %s10 = scalar_select 0, %s9, %s7
  $region1: #{tpu_custom_call.1} parent=0
    #allocation2 [shape = 'u8[8192]{0}', space=vmem, size = 0x2000, scoped, tag = 'input window, operand 0, single buffered']
    #allocation3 [shape = 's32[1]{0}', space=sflag, size = 0x4, scoped, tag = 'scoped memory for tpu_custom_call.1']
    #allocation4 [shape = 's32[1]{0}', space=sflag, size = 0x4, scoped, tag = 'scoped memory for tpu_custom_call.1']
    #allocation5 [shape = 'u8[8192]{0}', space=vmem, size = 0x2000, scoped, tag = 'input window, operand 1, single buffered']
    #allocation6 [shape = 's32[1]{0}', space=sflag, size = 0x4, scoped, tag = 'scoped memory for tpu_custom_call.1']
    #allocation7 [shape = 'u8[16384]{0}', space=vmem, size = 0x4000, scoped, tag = 'input window, operand 2, single buffered']
    #allocation8 [shape = 'u8[8192]{0}', space=vmem, size = 0x2000, scoped, tag = 'output window, operand 0, single buffered']
    %11 = vsyncpa [#allocation3], 0
    %12 = vsyncpa [#allocation6], 0
    %13 = vsyncpa [#allocation4], 0
    // Predicated region
    $region2: #{tpu_custom_call.1} parent=1 // pred_check
      _
    $region3: #{tpu_custom_call.1} parent=1 // pred_check_branch
      %15 = sbr.rel (0) target = $region5
    $region4: #{tpu_custom_call.1} parent=1 // pred_region
      %s17 = ssub.s32 256, 256
      %18 = vsyncadd [#allocation3], %s17
      %s19 = sshll.u32 [#allocation2], 4
      %s20 = int_to_ptr.vmem [resolvable:$true] %s19
      %25 = dma.hbm_to_vmem [thread:$0]  %s0, 256, %s20, [#allocation3], 128, 128, 8
    $region5: #{tpu_custom_call.1} parent=1 // pred_fallthru
      _
    // Predicated region
    $region6: #{tpu_custom_call.1} parent=1 // pred_check
      _
    $region7: #{tpu_custom_call.1} parent=1 // pred_check_branch
      %27 = sbr.rel (0) target = $region9
    $region8: #{tpu_custom_call.1} parent=1 // pred_region
      %s29 = ssub.s32 256, 256
      %30 = vsyncadd [#allocation6], %s29
      %s31 = sshll.u32 [#allocation5], 4
      %s32 = int_to_ptr.vmem [resolvable:$true] %s31
      %37 = dma.hbm_to_vmem [thread:$0]  %s1, 256, %s32, [#allocation6], 128, 128, 8
    $region9: #{tpu_custom_call.1} parent=1 // pred_fallthru
      _
    // Predicated region
    $region10: #{tpu_custom_call.1} parent=1 // pred_check
      _
    $region11: #{tpu_custom_call.1} parent=1 // pred_check_branch
      %39 = sbr.rel (0) target = $region13
    $region12: #{tpu_custom_call.1} parent=1 // pred_region
      %s41 = ssub.s32 512, 512
      %42 = vsyncadd [#allocation6], %s41
      %s43 = sshll.u32 [#allocation7], 4
      %s44 = int_to_ptr.vmem [resolvable:$true] %s43
      %49 = dma.hbm_to_vmem [thread:$0]  %s2, 512, %s44, [#allocation6], 128, 128, 8
    $region13: #{tpu_custom_call.1} parent=1 // pred_fallthru
      _
    // Predicated region
    $region14: #{tpu_custom_call.1} parent=1 // pred_check
      _
    $region15: #{tpu_custom_call.1} parent=1 // pred_check_branch
      %51 = sbr.rel (0) target = $region17
    $region16: #{tpu_custom_call.1} parent=1 // pred_region
      _
    $region17: #{tpu_custom_call.1} parent=1 // pred_fallthru
      _
    // Predicated region
    $region18: #{tpu_custom_call.1} parent=1 // pred_check
      _
    $region19: #{tpu_custom_call.1} parent=1 // pred_check_branch
      %53 = sbr.rel (0) target = $region21
    $region20: #{tpu_custom_call.1} parent=1 // pred_region
      _
    $region21: #{tpu_custom_call.1} parent=1 // pred_fallthru
      _
    // Predicated region
    $region22: #{tpu_custom_call.1} parent=1 // pred_check
      _
    $region23: #{tpu_custom_call.1} parent=1 // pred_check_branch
      %55 = sbr.rel (0) target = $region25
    $region24: #{tpu_custom_call.1} parent=1 // pred_region
      _
    $region25: #{tpu_custom_call.1} parent=1 // pred_fallthru
      _
    // Predicated region
    $region26: #{tpu_custom_call.1} parent=1 // pred_check
      _
    $region27: #{tpu_custom_call.1} parent=1 // pred_check_branch
      %57 = sbr.rel (0) target = $region29
    $region28: #{tpu_custom_call.1} parent=1 // pred_region
      %58 = dma.done [#allocation3], 256
    $region29: #{tpu_custom_call.1} parent=1 // pred_fallthru
      _
    // Predicated region
    $region30: #{tpu_custom_call.1} parent=1 // pred_check
      _
    $region31: #{tpu_custom_call.1} parent=1 // pred_check_branch
      %60 = sbr.rel (0) target = $region33
    $region32: #{tpu_custom_call.1} parent=1 // pred_region
      %61 = dma.done [#allocation6], 256
    $region33: #{tpu_custom_call.1} parent=1 // pred_fallthru
      _
    // Predicated region
    $region34: #{tpu_custom_call.1} parent=1 // pred_check
      _
    $region35: #{tpu_custom_call.1} parent=1 // pred_check_branch
      %63 = sbr.rel (0) target = $region37
    $region36: #{tpu_custom_call.1} parent=1 // pred_region
      %64 = dma.done [#allocation6], 512
    $region37: #{tpu_custom_call.1} parent=1 // pred_fallthru
      _
    %v65 = vld [vmem:[#allocation2] sm:$0xff]
    %v66 = vld [vmem:[#allocation2 + $0x8] sm:$0xff]
    %v67 = vld [vmem:[#allocation7] sm:$0xff]
    %v68 = vld [vmem:[#allocation7 + $0x8] sm:$0xff]
    %v69 = vld [vmem:[#allocation7 + $0x10] sm:$0xff]
    %v70 = vld [vmem:[#allocation7 + $0x18] sm:$0xff]
    %v71 = vld [vmem:[%s3] sm:$0x1]
    %v73 = vlaneseq
    %v74 = vshrl.u32 %v73, 7
    %v75 = vsub.s32 0, %v74
    %v76 = vrot.slane %v71, %v75
    %vm78 = vcmask 261120
    %v80 = vsel %vm78, %v65, 0
    %v83 = vsel %vm78, %v66, 0
    %v86 = vsel %vm78, %v67, 0
    %v89 = vsel %vm78, %v68, 0
    %v92 = vsel %vm78, %v69, 0
    %v95 = vsel %vm78, %v70, 0
    %97 = vmatprep.subr.mxu0 0.0
    %98 = vmatpush1.xpose.msra.mxu0 %v86
    %99 = vmatprep.subr.mxu0 0.0
    %100 = vmatpush1.xpose.msra.mxu0 %v89
    %101 = vmatprep.subr.mxu0 0.0
    %102 = vmatpush1.xpose.msra.mxu0 %v92
    %103 = vmatprep.subr.mxu0 0.0
    %104 = vmatpush1.xpose.msra.mxu0 %v95
    %105 = vmatprep.subr.mxu0 0.0
    %106 = vmatpush1.xpose.msra.mxu0 0.0
    %107 = vmatprep.subr.mxu0 0.0
    %108 = vmatpush1.xpose.msra.mxu0 0.0
    %109 = vmatprep.subr.mxu0 0.0
    %110 = vmatpush1.xpose.msra.mxu0 0.0
    %111 = vmatprep.subr.mxu0 0.0
    %112 = vmatpush1.xpose.msra.mxu0 0.0
    %113 = vmatprep.subr.mxu0 0.0
    %114 = vmatpush1.xpose.msra.mxu0 0.0
    %115 = vmatprep.subr.mxu0 0.0
    %116 = vmatpush1.xpose.msra.mxu0 0.0
    %117 = vmatprep.subr.mxu0 0.0
    %118 = vmatpush1.xpose.msra.mxu0 0.0
    %119 = vmatprep.subr.mxu0 0.0
    %120 = vmatpush1.xpose.msra.mxu0 0.0
    %121 = vmatprep.subr.mxu0 0.0
    %122 = vmatpush1.xpose.msra.mxu0 0.0
    %123 = vmatprep.subr.mxu0 0.0
    %124 = vmatpush1.xpose.msra.mxu0 0.0
    %125 = vmatprep.subr.mxu0 0.0
    %126 = vmatpush1.xpose.msra.mxu0 0.0
    %127 = vmatprep.subr.mxu0 0.0
    %128 = vmatpush1.xpose.msra.mxu0 0.0
    %129 = vmatprep.subr.mxu0 0.0
    %130 = vmatpush1.xpose.msra.mxu0 0.0
    %131 = vmatprep.subr.mxu0 0.0
    %132 = vmatpush1.xpose.msra.mxu0 0.0
    %133 = vmatprep.subr.mxu0 0.0
    %134 = vmatpush1.xpose.msra.mxu0 0.0
    %135 = vmatprep.subr.mxu0 0.0
    %136 = vmatpush1.xpose.msra.mxu0 0.0
    %137 = vmatprep.subr.mxu0 0.0
    %138 = vmatpush1.xpose.msra.mxu0 0.0
    %139 = vmatprep.subr.mxu0 0.0
    %140 = vmatpush1.xpose.msra.mxu0 0.0
    %141 = vmatprep.subr.mxu0 0.0
    %142 = vmatpush1.xpose.msra.mxu0 0.0
    %143 = vmatprep.subr.mxu0 0.0
    %144 = vmatpush1.xpose.msra.mxu0 0.0
    %145 = vmatprep.subr.mxu0 0.0
    %146 = vmatpush1.xpose.msra.mxu0 0.0
    %147 = vmatprep.subr.mxu0 0.0
    %148 = vmatpush1.xpose.msra.mxu0 0.0
    %149 = vmatprep.subr.mxu0 0.0
    %150 = vmatpush1.xpose.msra.mxu0 0.0
    %151 = vmatprep.subr.mxu0 0.0
    %152 = vmatpush1.xpose.msra.mxu0 0.0
    %153 = vmatprep.subr.mxu0 0.0
    %154 = vmatpush1.xpose.msra.mxu0 0.0
    %155 = vmatprep.subr.mxu0 0.0
    %156 = vmatpush1.xpose.msra.mxu0 0.0
    %157 = vmatprep.subr.mxu0 0.0
    %158 = vmatpush1.xpose.msra.mxu0 0.0
    %159 = vmatprep.subr.mxu0 0.0
    %160 = vmatpush1.xpose.msra.mxu0 0.0
    %161 = vmatprep.mubr.f32.mxu0 0.0
    %162 = vmatmul.mubr.f32.gmra.mrb[0].mxu0 %v80
    %v163 = vpop.f32.mrb[0].mxu0
    %v164 = vadd.f32 %v76, %v163
    %v165 = vpop.f32.mrb[0].mxu0
    %166 = vmatprep.mubr.f32.mxu0 0.0
    %167 = vmatmul.mubr.f32.gmra.mrb[0].mxu0 %v83
    %v168 = vpop.f32.mrb[0].mxu0
    %v169 = vadd.f32 %v76, %v168
    %v170 = vpop.f32.mrb[0].mxu0
    %171 = vdwg.mxu0
    %v172 = vld [vmem:[#allocation5] sm:$0xff]
    %v173 = vld [vmem:[#allocation5 + $0x8] sm:$0xff]
    %v174 = vadd.f32 %v164, %v172
    %v175 = vadd.f32 %v169, %v173
    %v176 = vsel %vm78, %v174, 0.0
    %177 = vadd.xlane.f32.xlu0 %v176
    %v178 = vpop.xlane.xlu0 %177
    %v179 = vsel %vm78, %v175, 0.0
    %180 = vadd.xlane.f32.xlu0 %v179
    %v181 = vpop.xlane.xlu0 %180
    %v182 = vrcp.pop 32.0
    %v183 = vmul.f32 %v178, %v182
    %v184 = vmul.f32 %v181, %v182
    %v185 = vsub.f32 %v174, %v183
    %v186 = vsub.f32 %v175, %v184
    %v187 = vmul.f32 %v185, %v185
    %v188 = vmul.f32 %v186, %v186
    %v189 = vsel %vm78, %v187, 0.0
    %190 = vadd.xlane.f32.xlu0 %v189
    %v191 = vpop.xlane.xlu0 %190
    %v192 = vsel %vm78, %v188, 0.0
    %193 = vadd.xlane.f32.xlu0 %v192
    %v194 = vpop.xlane.xlu0 %193
    %v195 = vmul.f32 %v191, %v182
    %v196 = vmul.f32 %v194, %v182
    %v197 = vadd.f32 %v195, 1e-12
    %v198 = vadd.f32 %v196, 1e-12
    %v199 = vrsqrt.pop %v197
    %v200 = vrsqrt.pop %v198
    %v201 = vmul.f32 %v185, %v199
    %v202 = vmul.f32 %v186, %v200
    %v203 = vld [vmem:[%s4] sm:$0x1]
    %v205 = vlaneseq
    %v206 = vshrl.u32 %v205, 7
    %v207 = vsub.s32 0, %v206
    %v208 = vrot.slane %v203, %v207
    %v210 = vmul.f32 %v201, %v208
    %v211 = vmul.f32 %v202, %v208
    %v212 = vld [vmem:[%s5] sm:$0x1]
    %v214 = vlaneseq
    %v215 = vshrl.u32 %v214, 7
    %v216 = vsub.s32 0, %v215
    %v217 = vrot.slane %v212, %v216
    %v219 = vadd.f32 %v210, %v217
    %v220 = vadd.f32 %v211, %v217
    %221 = vst.msk [vmem:[#allocation8] sm:$0xff] %vm78, %v219
    %222 = vst.msk [vmem:[#allocation8 + $0x8] sm:$0xff] %vm78, %v220
    // Predicated region
    $region38: #{tpu_custom_call.1} parent=1 // pred_check
      _
    $region39: #{tpu_custom_call.1} parent=1 // pred_check_branch
      %224 = sbr.rel (0) target = $region41
    $region40: #{tpu_custom_call.1} parent=1 // pred_region
      %s226 = ssub.s32 256, 256
      %227 = vsyncadd [#allocation4], %s226
      %s228 = sshll.u32 [#allocation8], 4
      %s229 = int_to_ptr.vmem [resolvable:$true] %s228
      %234 = dma.vmem_to_hbm [thread:$0]  %s229, 256, %s6, [#allocation4], 128, 128, 8
    $region41: #{tpu_custom_call.1} parent=1 // pred_fallthru
      _
    // Predicated region
    $region42: #{tpu_custom_call.1} parent=1 // pred_check
      _
    $region43: #{tpu_custom_call.1} parent=1 // pred_check_branch
      %236 = sbr.rel (0) target = $region45
    $region44: #{tpu_custom_call.1} parent=1 // pred_region
      %237 = dma.done [#allocation4], 256
    $region45: #{tpu_custom_call.1} parent=1 // pred_fallthru
      _
    %238 = vsyncpa [#allocation3], 1
    %239 = vsyncpa [#allocation6], 1
    %240 = vsyncpa [#allocation4], 1

</llo_original>
